<compile_context>
chip_gen: v7x
topology: tpu7x:2x2x1
jax: 0.10.0
libtpu: 0.0.40
codegen_flags: <defaults>
</compile_context>

<pallas_src>
import jax
import jax.numpy as jnp
import numpy as np
from jax import lax
from jax.experimental import pallas as pl
from jax.experimental.pallas import tpu as pltpu

NEG_SLOPE = 0.01  # PyTorch F.leaky_relu default


def _leaky(x):
    return jnp.where(x > 0, x, NEG_SLOPE * x)


# ----------------------- fused Pallas kernel -----------------------

def nn4a_fused_kernel(xcol_ref, wc_ref, bc_ref, w1_ref, b1_ref, w2_ref, b2_ref, o_ref):
    """Fused conv(im2col) + leaky_relu + 2x2 maxpool + fc1 + leaky_relu + fc2.

    xcol_ref: (4*P*N, C*3*3)  im2col patches, rows ordered (pool_offset, p, n)
    wc_ref  : (C*3*3, OC)     true conv weight (no zero padding)
    bc_ref  : (1, OC)
    w1_ref  : (P, OC, H1p)    fc1 weight split per pooled spatial position p
    b1_ref  : (1, H1p)        (hidden padded to 128 lanes)
    w2_ref  : (H1p, NCp)      fc2 weight (output padded to 128 lanes)
    b2_ref  : (1, NCp)
    o_ref   : (N, NCp)
    """
    n = o_ref.shape[0]
    P = w1_ref.shape[0]              # Hp*Wp pooled spatial positions
    pn = P * n                       # rows per pool-offset block (= 8 at N=2)

    # conv-as-matmul + bias + leaky_relu (only positions that feed the pool)
    conv = jnp.dot(xcol_ref[...], wc_ref[...], preferred_element_type=jnp.float32)
    conv = _leaky(conv + bc_ref[...])                                        # (4*pn, OC)

    # 2x2/2 maxpool = elementwise max over the 4 pool-offset row blocks
    pooled = jnp.maximum(jnp.maximum(conv[0 * pn:1 * pn], conv[1 * pn:2 * pn]),
                         jnp.maximum(conv[2 * pn:3 * pn], conv[3 * pn:4 * pn]))  # (pn, OC)

    # fc1: one small matmul per pooled spatial position, accumulated in f32.
    # (row order (p, n) makes each slice a contiguous N-row block.)
    acc = jnp.dot(pooled[0:n], w1_ref[0], preferred_element_type=jnp.float32)
    for p in range(1, P):
        acc = acc + jnp.dot(pooled[p * n:(p + 1) * n], w1_ref[p],
                            preferred_element_type=jnp.float32)
    h = _leaky(acc + b1_ref[...])                                            # (n, H1p)

    # fc2 (lane-dense 128-wide output; wrapper slices to num_classes)
    out = jnp.dot(h, w2_ref[...], preferred_element_type=jnp.float32) + b2_ref[...]
    o_ref[...] = out.astype(o_ref.dtype)


# ----------------------- one-time weight preprocessing (hoisted) -----------------------

def prepare_params(Wc, bc, W1, b1, W2, b2, input_chw):
    """Build the fused-kernel weights ONCE (not on the forward path).

    Wc: (OC, C, 3, 3) conv weight, bc: (OC,)
    W1: (OC*Hp*Wp, H1), b1: (H1,)   [rows in PyTorch flatten order (oc, hp, wp)]
    W2: (H1, NC),       b2: (NC,)
    """
    C, H, W = input_chw
    Wc = np.asarray(Wc, np.float32)
    bc = np.asarray(bc, np.float32)
    W1 = np.asarray(W1, np.float32)
    b1 = np.asarray(b1, np.float32)
    W2 = np.asarray(W2, np.float32)
    b2 = np.asarray(b2, np.float32)

    OC, Cw, KH, KW = Wc.shape
    assert Cw == C
    SH = SW = 3
    Ho = (H - KH) // SH + 1
    Wo = (W - KW) // SW + 1
    Hp, Wp = Ho // 2, Wo // 2            # MaxPool2d(2,2) floors (drops last row/col)
    P = Hp * Wp
    F = OC * P
    assert W1.shape[0] == F, (W1.shape, F)
    H1 = W1.shape[1]
    NC = W2.shape[1]

    # True conv weight in im2col layout: rows ordered (c, kh, kw), cols = oc (~3 KB).
    wc_col = Wc.transpose(1, 2, 3, 0).reshape(C * KH * KW, OC)
    bc_row = bc.reshape(1, OC)

    # fc1 split per pooled spatial position p = hp*Wp + wp.  PyTorch flatten order
    # is f = oc*P + p, so W1 row (oc*P + p) -> w1_split[p, oc, :].  Hidden is
    # padded to 128 lanes; padded cols have zero weight + zero bias (leaky(0)=0)
    # and the matching fc2 rows are zero, so the result is unchanged.
    H1p = ((H1 + 127) // 128) * 128
    w1_split = np.zeros((P, OC, H1p), np.float32)
    w1_split[:, :, :H1] = W1.reshape(OC, P, H1).transpose(1, 0, 2)
    b1p = np.zeros((1, H1p), np.float32); b1p[0, :H1] = b1

    # fc2 padded to a lane-dense 128-wide output; padded rows/cols are zero.
    NCp = ((NC + 127) // 128) * 128
    w2p = np.zeros((H1p, NCp), np.float32); w2p[:H1, :NC] = W2
    b2p = np.zeros((1, NCp), np.float32); b2p[0, :NC] = b2

    weights = dict(wc=jnp.asarray(wc_col), bc=jnp.asarray(bc_row),
                   w1=jnp.asarray(w1_split), b1=jnp.asarray(b1p),
                   w2=jnp.asarray(w2p), b2=jnp.asarray(b2p))
    dims = dict(C=C, H=H, W=W, KH=KH, KW=KW, SH=SH, SW=SW,
                Hp=Hp, Wp=Wp, OC=OC, H1p=H1p, NC=NC, NCp=NCp)
    return weights, dims


# ----------------------- forward (single pallas_call) -----------------------

def make_nn4a_forward(weights, dims):
    """Returns a jitted forward(x) closure over the prepared params."""
    C, KH, KW, SH, SW = dims["C"], dims["KH"], dims["KW"], dims["SH"], dims["SW"]
    Hp, Wp, OC = dims["Hp"], dims["Wp"], dims["OC"]
    H1p, NC, NCp = dims["H1p"], dims["NC"], dims["NCp"]
    P = Hp * Wp
    Kc = C * KH * KW
    wbytes = sum(int(np.prod(w.shape)) * 4 for w in weights.values())

    @jax.jit
    def forward(x):
        N = x.shape[0]
        # Tiny XLA-side im2col of the ~9 KB input:
        # rows ordered (dh, dw, hp, wp, n), cols ordered (c, kh, kw).
        x0 = x[:, :, :SH * 2 * Hp, :SW * 2 * Wp]
        x0 = x0.reshape(N, C, Hp, 2, KH, Wp, 2, KW)
        xcol = x0.transpose(3, 6, 2, 5, 0, 1, 4, 7).reshape(4 * P * N, Kc)

        cost = pl.CostEstimate(
            flops=2 * N * (4 * P * Kc * OC + P * OC * H1p + H1p * NCp),
            bytes_accessed=4 * P * N * Kc * 4 + wbytes + N * NCp * 4,
            transcendentals=0)

        vmem = pl.BlockSpec(memory_space=pltpu.MemorySpace.VMEM)
        out = pl.pallas_call(
            nn4a_fused_kernel,
            out_shape=jax.ShapeDtypeStruct((N, NCp), jnp.float32),
            in_specs=[vmem] * 7,
            out_specs=vmem,
            cost_estimate=cost,
        )(xcol, weights["wc"], weights["bc"], weights["w1"],
          weights["b1"], weights["w2"], weights["b2"])
        return out[:, :NC]

    return forward


# ----------------------- pure-JAX reference (correctness check) -----------------------

def nn4a_reference(x, Wc, bc, W1, b1, W2, b2):
    conv = lax.conv_general_dilated(
        x, Wc, window_strides=(3, 3), padding='VALID',
        dimension_numbers=('NCHW', 'OIHW', 'NCHW')) + bc.reshape(1, -1, 1, 1)
    conv = _leaky(conv)
    pooled = lax.reduce_window(conv, -jnp.inf, lax.max,
                               (1, 1, 2, 2), (1, 1, 2, 2), 'VALID')
    flat = pooled.reshape(x.shape[0], -1)
    h = _leaky(flat @ W1 + b1)
    return h @ W2 + b2


if __name__ == "__main__":
    num_classes = 10
    N, C, H, W = 2, 4, 16, 16
    OC, KH, KW = 20, 3, 3
    HIDDEN = 100

    Ho = (H - KH) // 3 + 1              # 5
    Wo = (W - KW) // 3 + 1              # 5
    F_in = OC * (Ho // 2) * (Wo // 2)   # 20 * 2 * 2 = 80

    key = jax.random.PRNGKey(0)
    ks = jax.random.split(key, 7)
    x  = jax.random.normal(ks[0], (N, C, H, W), jnp.float32)
    Wc = jax.random.normal(ks[1], (OC, C, KH, KW), jnp.float32) * 0.1
    bc = jax.random.normal(ks[2], (OC,), jnp.float32) * 0.1
    W1 = jax.random.normal(ks[3], (F_in, HIDDEN), jnp.float32) * 0.1
    b1 = jax.random.normal(ks[4], (HIDDEN,), jnp.float32) * 0.1
    W2 = jax.random.normal(ks[5], (HIDDEN, num_classes), jnp.float32) * 0.1
    b2 = jax.random.normal(ks[6], (num_classes,), jnp.float32) * 0.1

    weights, dims = prepare_params(Wc, bc, W1, b1, W2, b2, (C, H, W))   # one-time
    nn4a_forward = make_nn4a_forward(weights, dims)

    out = jax.block_until_ready(nn4a_forward(x))

    ref = nn4a_reference(x, Wc, bc, W1, b1, W2, b2)
    assert out.shape == (N, num_classes)
    np.testing.assert_allclose(np.asarray(out), np.asarray(ref), rtol=1e-4, atol=1e-4)
    print("KERNEL_OK")
</pallas_src>

<mosaic_0001>
module attributes {stable_mosaic.version = 11 : i64} {
  func.func @nn4a_fused_kernel(%arg0: memref<32x36xf32, #tpu.memory_space<vmem>>, %arg1: memref<36x20xf32, #tpu.memory_space<vmem>>, %arg2: memref<1x20xf32, #tpu.memory_space<vmem>>, %arg3: memref<4x20x128xf32, #tpu.memory_space<vmem>>, %arg4: memref<1x128xf32, #tpu.memory_space<vmem>>, %arg5: memref<128x128xf32, #tpu.memory_space<vmem>>, %arg6: memref<1x128xf32, #tpu.memory_space<vmem>>, %arg7: memref<2x128xf32, #tpu.memory_space<vmem>>) attributes {dimension_semantics = [], scalar_prefetch = 0 : i64, scratch_operands = 0 : i64, tpu.core_type = #tpu.core_type<tc>} {
    %c0 = arith.constant 0 : index
    %c0_0 = arith.constant 0 : index
    %0 = vector.load %arg0[%c0, %c0_0] : memref<32x36xf32, #tpu.memory_space<vmem>>, vector<32x36xf32>
    %c0_1 = arith.constant 0 : index
    %c0_2 = arith.constant 0 : index
    %1 = vector.load %arg1[%c0_1, %c0_2] : memref<36x20xf32, #tpu.memory_space<vmem>>, vector<36x20xf32>
    %cst = arith.constant dense<0.000000e+00> : vector<32x20xf32>
    %2 = tpu.matmul %0, %1, %cst {dimension_numbers = #tpu.dot_dimension_numbers<[1], [0], [0], [1], [0, 0, 1, 1], [], []>} : vector<32x36xf32>, vector<36x20xf32>, vector<32x20xf32> -> vector<32x20xf32>
    %c0_3 = arith.constant 0 : index
    %c0_4 = arith.constant 0 : index
    %3 = vector.load %arg2[%c0_3, %c0_4] : memref<1x20xf32, #tpu.memory_space<vmem>>, vector<1x20xf32>
    %4 = vector.broadcast %3 : vector<1x20xf32> to vector<32x20xf32>
    %5 = arith.addf %2, %4 : vector<32x20xf32>
    %cst_5 = arith.constant 0.000000e+00 : f32
    %6 = vector.broadcast %cst_5 : f32 to vector<32x20xf32>
    %7 = arith.cmpf ogt, %5, %6 : vector<32x20xf32>
    %cst_6 = arith.constant 0.00999999977 : f32
    %8 = vector.broadcast %cst_6 : f32 to vector<32x20xf32>
    %9 = arith.mulf %8, %5 : vector<32x20xf32>
    %10 = arith.select %7, %5, %9 : vector<32x20xi1>, vector<32x20xf32>
    %11 = vector.extract_strided_slice %10 {offsets = [0, 0], sizes = [8, 20], strides = [1, 1]} : vector<32x20xf32> to vector<8x20xf32>
    %12 = vector.extract_strided_slice %10 {offsets = [8, 0], sizes = [8, 20], strides = [1, 1]} : vector<32x20xf32> to vector<8x20xf32>
    %13 = arith.maximumf %11, %12 : vector<8x20xf32>
    %14 = vector.extract_strided_slice %10 {offsets = [16, 0], sizes = [8, 20], strides = [1, 1]} : vector<32x20xf32> to vector<8x20xf32>
    %15 = vector.extract_strided_slice %10 {offsets = [24, 0], sizes = [8, 20], strides = [1, 1]} : vector<32x20xf32> to vector<8x20xf32>
    %16 = arith.maximumf %14, %15 : vector<8x20xf32>
    %17 = arith.maximumf %13, %16 : vector<8x20xf32>
    %18 = vector.extract_strided_slice %17 {offsets = [0, 0], sizes = [2, 20], strides = [1, 1]} : vector<8x20xf32> to vector<2x20xf32>
    %c0_7 = arith.constant 0 : index
    %c0_8 = arith.constant 0 : index
    %c0_9 = arith.constant 0 : index
    %19 = vector.load %arg3[%c0_7, %c0_8, %c0_9] : memref<4x20x128xf32, #tpu.memory_space<vmem>>, vector<1x20x128xf32>
    %20 = vector.shape_cast %19 : vector<1x20x128xf32> to vector<20x128xf32>
    %cst_10 = arith.constant dense<0.000000e+00> : vector<2x128xf32>
    %21 = tpu.matmul %18, %20, %cst_10 {dimension_numbers = #tpu.dot_dimension_numbers<[1], [0], [0], [1], [0, 0, 1, 1], [], []>} : vector<2x20xf32>, vector<20x128xf32>, vector<2x128xf32> -> vector<2x128xf32>
    %22 = vector.extract_strided_slice %17 {offsets = [2, 0], sizes = [2, 20], strides = [1, 1]} : vector<8x20xf32> to vector<2x20xf32>
    %c1 = arith.constant 1 : index
    %c0_11 = arith.constant 0 : index
    %c0_12 = arith.constant 0 : index
    %23 = vector.load %arg3[%c1, %c0_11, %c0_12] : memref<4x20x128xf32, #tpu.memory_space<vmem>>, vector<1x20x128xf32>
    %24 = vector.shape_cast %23 : vector<1x20x128xf32> to vector<20x128xf32>
    %cst_13 = arith.constant dense<0.000000e+00> : vector<2x128xf32>
    %25 = tpu.matmul %22, %24, %cst_13 {dimension_numbers = #tpu.dot_dimension_numbers<[1], [0], [0], [1], [0, 0, 1, 1], [], []>} : vector<2x20xf32>, vector<20x128xf32>, vector<2x128xf32> -> vector<2x128xf32>
    %26 = arith.addf %21, %25 : vector<2x128xf32>
    %27 = vector.extract_strided_slice %17 {offsets = [4, 0], sizes = [2, 20], strides = [1, 1]} : vector<8x20xf32> to vector<2x20xf32>
    %c2 = arith.constant 2 : index
    %c0_14 = arith.constant 0 : index
    %c0_15 = arith.constant 0 : index
    %28 = vector.load %arg3[%c2, %c0_14, %c0_15] : memref<4x20x128xf32, #tpu.memory_space<vmem>>, vector<1x20x128xf32>
    %29 = vector.shape_cast %28 : vector<1x20x128xf32> to vector<20x128xf32>
    %cst_16 = arith.constant dense<0.000000e+00> : vector<2x128xf32>
    %30 = tpu.matmul %27, %29, %cst_16 {dimension_numbers = #tpu.dot_dimension_numbers<[1], [0], [0], [1], [0, 0, 1, 1], [], []>} : vector<2x20xf32>, vector<20x128xf32>, vector<2x128xf32> -> vector<2x128xf32>
    %31 = arith.addf %26, %30 : vector<2x128xf32>
    %32 = vector.extract_strided_slice %17 {offsets = [6, 0], sizes = [2, 20], strides = [1, 1]} : vector<8x20xf32> to vector<2x20xf32>
    %c3 = arith.constant 3 : index
    %c0_17 = arith.constant 0 : index
    %c0_18 = arith.constant 0 : index
    %33 = vector.load %arg3[%c3, %c0_17, %c0_18] : memref<4x20x128xf32, #tpu.memory_space<vmem>>, vector<1x20x128xf32>
    %34 = vector.shape_cast %33 : vector<1x20x128xf32> to vector<20x128xf32>
    %cst_19 = arith.constant dense<0.000000e+00> : vector<2x128xf32>
    %35 = tpu.matmul %32, %34, %cst_19 {dimension_numbers = #tpu.dot_dimension_numbers<[1], [0], [0], [1], [0, 0, 1, 1], [], []>} : vector<2x20xf32>, vector<20x128xf32>, vector<2x128xf32> -> vector<2x128xf32>
    %36 = arith.addf %31, %35 : vector<2x128xf32>
    %c0_20 = arith.constant 0 : index
    %c0_21 = arith.constant 0 : index
    %37 = vector.load %arg4[%c0_20, %c0_21] : memref<1x128xf32, #tpu.memory_space<vmem>>, vector<1x128xf32>
    %38 = vector.broadcast %37 : vector<1x128xf32> to vector<2x128xf32>
    %39 = arith.addf %36, %38 : vector<2x128xf32>
    %cst_22 = arith.constant 0.000000e+00 : f32
    %40 = vector.broadcast %cst_22 : f32 to vector<2x128xf32>
    %41 = arith.cmpf ogt, %39, %40 : vector<2x128xf32>
    %cst_23 = arith.constant 0.00999999977 : f32
    %42 = vector.broadcast %cst_23 : f32 to vector<2x128xf32>
    %43 = arith.mulf %42, %39 : vector<2x128xf32>
    %44 = arith.select %41, %39, %43 : vector<2x128xi1>, vector<2x128xf32>
    %c0_24 = arith.constant 0 : index
    %c0_25 = arith.constant 0 : index
    %45 = vector.load %arg5[%c0_24, %c0_25] : memref<128x128xf32, #tpu.memory_space<vmem>>, vector<128x128xf32>
    %cst_26 = arith.constant dense<0.000000e+00> : vector<2x128xf32>
    %46 = tpu.matmul %44, %45, %cst_26 {dimension_numbers = #tpu.dot_dimension_numbers<[1], [0], [0], [1], [0, 0, 1, 1], [], []>} : vector<2x128xf32>, vector<128x128xf32>, vector<2x128xf32> -> vector<2x128xf32>
    %c0_27 = arith.constant 0 : index
    %c0_28 = arith.constant 0 : index
    %47 = vector.load %arg6[%c0_27, %c0_28] : memref<1x128xf32, #tpu.memory_space<vmem>>, vector<1x128xf32>
    %48 = vector.broadcast %47 : vector<1x128xf32> to vector<2x128xf32>
    %49 = arith.addf %46, %48 : vector<2x128xf32>
    %c0_29 = arith.constant 0 : index
    %c0_30 = arith.constant 0 : index
    %50 = vector.load %arg7[%c0_29, %c0_30] : memref<2x128xf32, #tpu.memory_space<vmem>>, vector<2x128xf32>
    tpu.vector_store %arg7[%c0_29, %c0_30], %49 {strides = array<i32>} : memref<2x128xf32, #tpu.memory_space<vmem>>, vector<2x128xf32>,
    return
  }
}

</mosaic_0001>

<llo_original>
// kernel: forward.1
$region0: #{forward.1}
  #allocation0 [shape = 'u32[]', space=smem, size = 0x4, offset = 0x4, fixed_abs, tag = 'smem constant byte address 0x4 - core index']
  #allocation1 [shape = 'u32[144,128]{1,0:T(1,128)}', space=vmem, size = 0x12000, scoped, tag = 'internal scratch']
  %s0 = inlined_call_operand.vmem [shape: f32[32,36], index: 0, kind: input, shape index: {}]
  %s1 = inlined_call_operand.vmem [shape: f32[36,20], index: 1, kind: input, shape index: {}]
  %s2 = inlined_call_operand.vmem [shape: f32[1,20], index: 2, kind: input, shape index: {}]
  %s3 = inlined_call_operand.vmem [shape: f32[4,20,128], index: 3, kind: input, shape index: {}]
  %s4 = inlined_call_operand.vmem [shape: f32[1,128], index: 4, kind: input, shape index: {}]
  %s5 = inlined_call_operand.vmem [shape: f32[128,128], index: 5, kind: input, shape index: {}]
  %s6 = inlined_call_operand.vmem [shape: f32[1,128], index: 6, kind: input, shape index: {}]
  %s7 = inlined_call_operand.hbm [shape: f32[2,128], index: 7, kind: output, shape index: {}]
  %s8 = sld [smem:[#allocation0]]
  $region38: #{forward.1} parent=0
    _
  %s10 = ssub.s32 1, %s8
  %s11 = scalar_select 0, %s10, %s8
  $region1: #{forward.1} parent=0
    #allocation2 [shape = 'u8[1024]{0}', space=vmem, size = 0x400, scoped, tag = 'output window, operand 0, single buffered']
    #allocation3 [shape = 's32[1]{0}', space=sflag, size = 0x4, scoped, tag = 'scoped memory for forward.1']
    %12 = vsyncpa [#allocation3], 0
    // Predicated region
    $region2: #{forward.1} parent=1 // pred_check
      _
    $region3: #{forward.1} parent=1 // pred_check_branch
      %14 = sbr.rel (0) target = $region5
    $region4: #{forward.1} parent=1 // pred_region
      _
    $region5: #{forward.1} parent=1 // pred_fallthru
      _
    // Predicated region
    $region6: #{forward.1} parent=1 // pred_check
      _
    $region7: #{forward.1} parent=1 // pred_check_branch
      %16 = sbr.rel (0) target = $region9
    $region8: #{forward.1} parent=1 // pred_region
      _
    $region9: #{forward.1} parent=1 // pred_fallthru
      _
    // Predicated region
    $region10: #{forward.1} parent=1 // pred_check
      _
    $region11: #{forward.1} parent=1 // pred_check_branch
      %18 = sbr.rel (0) target = $region13
    $region12: #{forward.1} parent=1 // pred_region
      _
    $region13: #{forward.1} parent=1 // pred_fallthru
      _
    // Predicated region
    $region14: #{forward.1} parent=1 // pred_check
      _
    $region15: #{forward.1} parent=1 // pred_check_branch
      %20 = sbr.rel (0) target = $region17
    $region16: #{forward.1} parent=1 // pred_region
      _
    $region17: #{forward.1} parent=1 // pred_fallthru
      _
    // Predicated region
    $region18: #{forward.1} parent=1 // pred_check
      _
    $region19: #{forward.1} parent=1 // pred_check_branch
      %22 = sbr.rel (0) target = $region21
    $region20: #{forward.1} parent=1 // pred_region
      _
    $region21: #{forward.1} parent=1 // pred_fallthru
      _
    // Predicated region
    $region22: #{forward.1} parent=1 // pred_check
      _
    $region23: #{forward.1} parent=1 // pred_check_branch
      %24 = sbr.rel (0) target = $region25
    $region24: #{forward.1} parent=1 // pred_region
      _
    $region25: #{forward.1} parent=1 // pred_fallthru
      _
    // Predicated region
    $region26: #{forward.1} parent=1 // pred_check
      _
    $region27: #{forward.1} parent=1 // pred_check_branch
      %26 = sbr.rel (0) target = $region29
    $region28: #{forward.1} parent=1 // pred_region
      _
    $region29: #{forward.1} parent=1 // pred_fallthru
      _
    %v27 = vld [vmem:[%s0] sm:$0xff]
    %v28 = vld [vmem:[%s0 + $0x8] sm:$0xff]
    %v29 = vld [vmem:[%s0 + $0x10] sm:$0xff]
    %v30 = vld [vmem:[%s0 + $0x18] sm:$0xff]
    %v31 = vld [vmem:[%s1] sm:$0xff]
    %v32 = vld [vmem:[%s1 + $0x8] sm:$0xff]
    %v33 = vld [vmem:[%s1 + $0x10] sm:$0xff]
    %v34 = vld [vmem:[%s1 + $0x18] sm:$0xff]
    %v35 = vld [vmem:[%s1 + $0x20] sm:$0xf]
    %v36 = vld [vmem:[%s2] sm:$0x1]
    %v38 = vlaneseq
    %v39 = vshrl.u32 %v38, 7
    %v40 = vsub.s32 0, %v39
    %v41 = vrot.slane %v36, %v40
    %vm43 = vcmask 293888
    %v45 = vsel %vm43, %v27, 0
    %v48 = vsel %vm43, %v28, 0
    %v51 = vsel %vm43, %v29, 0
    %v54 = vsel %vm43, %v30, 0
    %vm56 = vcmask 1043456
    %v58 = vsel %vm56, %v35, 0
    %60 = vmatprep.subr.mxu0 0.0
    %61 = vmatpush1.msra.mxu0 %v31
    %62 = vmatprep.subr.mxu0 0.0
    %63 = vmatpush1.msra.mxu0 %v32
    %64 = vmatprep.subr.mxu0 0.0
    %65 = vmatpush1.msra.mxu0 %v33
    %66 = vmatprep.subr.mxu0 0.0
    %67 = vmatpush1.msra.mxu0 %v34
    %68 = vmatprep.subr.mxu0 0.0
    %69 = vmatpush1.msra.mxu0 %v58
    %70 = vmatprep.subr.mxu0 0.0
    %71 = vmatpush1.msra.mxu0 0.0
    %72 = vmatprep.subr.mxu0 0.0
    %73 = vmatpush1.msra.mxu0 0.0
    %74 = vmatprep.subr.mxu0 0.0
    %75 = vmatpush1.msra.mxu0 0.0
    %76 = vmatprep.subr.mxu0 0.0
    %77 = vmatpush1.msra.mxu0 0.0
    %78 = vmatprep.subr.mxu0 0.0
    %79 = vmatpush1.msra.mxu0 0.0
    %80 = vmatprep.subr.mxu0 0.0
    %81 = vmatpush1.msra.mxu0 0.0
    %82 = vmatprep.subr.mxu0 0.0
    %83 = vmatpush1.msra.mxu0 0.0
    %84 = vmatprep.subr.mxu0 0.0
    %85 = vmatpush1.msra.mxu0 0.0
    %86 = vmatprep.subr.mxu0 0.0
    %87 = vmatpush1.msra.mxu0 0.0
    %88 = vmatprep.subr.mxu0 0.0
    %89 = vmatpush1.msra.mxu0 0.0
    %90 = vmatprep.subr.mxu0 0.0
    %91 = vmatpush1.msra.mxu0 0.0
    %92 = vmatprep.subr.mxu0 0.0
    %93 = vmatpush1.msra.mxu0 0.0
    %94 = vmatprep.subr.mxu0 0.0
    %95 = vmatpush1.msra.mxu0 0.0
    %96 = vmatprep.subr.mxu0 0.0
    %97 = vmatpush1.msra.mxu0 0.0
    %98 = vmatprep.subr.mxu0 0.0
    %99 = vmatpush1.msra.mxu0 0.0
    %100 = vmatprep.subr.mxu0 0.0
    %101 = vmatpush1.msra.mxu0 0.0
    %102 = vmatprep.subr.mxu0 0.0
    %103 = vmatpush1.msra.mxu0 0.0
    %104 = vmatprep.subr.mxu0 0.0
    %105 = vmatpush1.msra.mxu0 0.0
    %106 = vmatprep.subr.mxu0 0.0
    %107 = vmatpush1.msra.mxu0 0.0
    %108 = vmatprep.subr.mxu0 0.0
    %109 = vmatpush1.msra.mxu0 0.0
    %110 = vmatprep.subr.mxu0 0.0
    %111 = vmatpush1.msra.mxu0 0.0
    %112 = vmatprep.subr.mxu0 0.0
    %113 = vmatpush1.msra.mxu0 0.0
    %114 = vmatprep.subr.mxu0 0.0
    %115 = vmatpush1.msra.mxu0 0.0
    %116 = vmatprep.subr.mxu0 0.0
    %117 = vmatpush1.msra.mxu0 0.0
    %118 = vmatprep.subr.mxu0 0.0
    %119 = vmatpush1.msra.mxu0 0.0
    %120 = vmatprep.subr.mxu0 0.0
    %121 = vmatpush1.msra.mxu0 0.0
    %122 = vmatprep.subr.mxu0 0.0
    %123 = vmatpush1.msra.mxu0 0.0
    %124 = vmatprep.mubr.f32.mxu0 0.0
    %125 = vmatmul.mubr.f32.gmra.mrb[0].mxu0 %v45
    %v126 = vpop.f32.mrb[0].mxu0
    %v127 = vadd.f32 %v41, %v126
    %v128 = vpop.f32.mrb[0].mxu0
    %129 = vmatprep.mubr.f32.mxu0 0.0
    %130 = vmatmul.mubr.f32.gmra.mrb[0].mxu0 %v48
    %v131 = vpop.f32.mrb[0].mxu0
    %v132 = vadd.f32 %v41, %v131
    %v133 = vpop.f32.mrb[0].mxu0
    %134 = vmatprep.mubr.f32.mxu0 0.0
    %135 = vmatmul.mubr.f32.gmra.mrb[0].mxu0 %v51
    %v136 = vpop.f32.mrb[0].mxu0
    %v137 = vadd.f32 %v41, %v136
    %v138 = vpop.f32.mrb[0].mxu0
    %139 = vmatprep.mubr.f32.mxu0 0.0
    %140 = vmatmul.mubr.f32.gmra.mrb[0].mxu0 %v54
    %v141 = vpop.f32.mrb[0].mxu0
    %v142 = vadd.f32 %v41, %v141
    %v143 = vpop.f32.mrb[0].mxu0
    %144 = vdwg.mxu0
    %vm145 = vcmp.gt.f32.partialorder %v127, 0.0
    %vm146 = vcmp.gt.f32.partialorder %v132, 0.0
    %vm147 = vcmp.gt.f32.partialorder %v137, 0.0
    %vm148 = vcmp.gt.f32.partialorder %v142, 0.0
    %v149 = vmul.f32 %v127, 0.01
    %v150 = vmul.f32 %v132, 0.01
    %v151 = vmul.f32 %v137, 0.01
    %v152 = vmul.f32 %v142, 0.01
    %v153 = vsel %vm145, %v127, %v149
    %v154 = vsel %vm146, %v132, %v150
    %v155 = vsel %vm147, %v137, %v151
    %v156 = vsel %vm148, %v142, %v152
    %v157 = vmax.f32 %v153, %v154
    %v158 = vmax.f32 %v155, %v156
    %v159 = vmax.f32 %v157, %v158
    %v160 = vld [vmem:[%s3] sm:$0xff]
    %v161 = vld [vmem:[%s3 + $0x8] sm:$0xff]
    %v162 = vld [vmem:[%s3 + $0x10] sm:$0xf]
    %s163 = scalar_lea.vmem %s3, 24
    %v164 = vld [vmem:[%s163] sm:$0xff]
    %v165 = vld [vmem:[%s163 + $0x8] sm:$0xff]
    %v166 = vld [vmem:[%s163 + $0x10] sm:$0xf]
    %v168 = vrot.slane %v159, 2
    %vm169 = vcmask 162816
    %v170 = vsel %vm169, %v168, 0
    %v173 = vsel %vm56, %v166, 0
    %175 = vmatprep.subr.mxu0 0.0
    %176 = vmatpush1.msra.mxu0 %v164
    %177 = vmatprep.subr.mxu0 0.0
    %178 = vmatpush1.msra.mxu0 %v165
    %179 = vmatprep.subr.mxu0 0.0
    %180 = vmatpush1.msra.mxu0 %v173
    %181 = vmatprep.subr.mxu0 0.0
    %182 = vmatpush1.msra.mxu0 0.0
    %183 = vmatprep.subr.mxu0 0.0
    %184 = vmatpush1.msra.mxu0 0.0
    %185 = vmatprep.subr.mxu0 0.0
    %186 = vmatpush1.msra.mxu0 0.0
    %187 = vmatprep.subr.mxu0 0.0
    %188 = vmatpush1.msra.mxu0 0.0
    %189 = vmatprep.subr.mxu0 0.0
    %190 = vmatpush1.msra.mxu0 0.0
    %191 = vmatprep.subr.mxu0 0.0
    %192 = vmatpush1.msra.mxu0 0.0
    %193 = vmatprep.subr.mxu0 0.0
    %194 = vmatpush1.msra.mxu0 0.0
    %195 = vmatprep.subr.mxu0 0.0
    %196 = vmatpush1.msra.mxu0 0.0
    %197 = vmatprep.subr.mxu0 0.0
    %198 = vmatpush1.msra.mxu0 0.0
    %199 = vmatprep.subr.mxu0 0.0
    %200 = vmatpush1.msra.mxu0 0.0
    %201 = vmatprep.subr.mxu0 0.0
    %202 = vmatpush1.msra.mxu0 0.0
    %203 = vmatprep.subr.mxu0 0.0
    %204 = vmatpush1.msra.mxu0 0.0
    %205 = vmatprep.subr.mxu0 0.0
    %206 = vmatpush1.msra.mxu0 0.0
    %207 = vmatprep.subr.mxu0 0.0
    %208 = vmatpush1.msra.mxu0 0.0
    %209 = vmatprep.subr.mxu0 0.0
    %210 = vmatpush1.msra.mxu0 0.0
    %211 = vmatprep.subr.mxu0 0.0
    %212 = vmatpush1.msra.mxu0 0.0
    %213 = vmatprep.subr.mxu0 0.0
    %214 = vmatpush1.msra.mxu0 0.0
    %215 = vmatprep.subr.mxu0 0.0
    %216 = vmatpush1.msra.mxu0 0.0
    %217 = vmatprep.subr.mxu0 0.0
    %218 = vmatpush1.msra.mxu0 0.0
    %219 = vmatprep.subr.mxu0 0.0
    %220 = vmatpush1.msra.mxu0 0.0
    %221 = vmatprep.subr.mxu0 0.0
    %222 = vmatpush1.msra.mxu0 0.0
    %223 = vmatprep.subr.mxu0 0.0
    %224 = vmatpush1.msra.mxu0 0.0
    %225 = vmatprep.subr.mxu0 0.0
    %226 = vmatpush1.msra.mxu0 0.0
    %227 = vmatprep.subr.mxu0 0.0
    %228 = vmatpush1.msra.mxu0 0.0
    %229 = vmatprep.subr.mxu0 0.0
    %230 = vmatpush1.msra.mxu0 0.0
    %231 = vmatprep.subr.mxu0 0.0
    %232 = vmatpush1.msra.mxu0 0.0
    %233 = vmatprep.subr.mxu0 0.0
    %234 = vmatpush1.msra.mxu0 0.0
    %235 = vmatprep.subr.mxu0 0.0
    %236 = vmatpush1.msra.mxu0 0.0
    %237 = vmatprep.subr.mxu0 0.0
    %238 = vmatpush1.msra.mxu0 0.0
    %239 = vmatprep.mubr.f32.mxu0 0.0
    %240 = vmatmul.mubr.f32.gmra.mrb[0].mxu0 %v170
    %v241 = vpop.f32.mrb[0].mxu0
    %v242 = vadd.f32 0.0, %v241
    %v243 = vpop.f32.mrb[0].mxu0
    %244 = vdwg.mxu0
    %v245 = vsel %vm169, %v159, 0
    %v248 = vsel %vm56, %v162, 0
    %250 = vmatprep.subr.mxu0 0.0
    %251 = vmatpush1.msra.mxu0 %v160
    %252 = vmatprep.subr.mxu0 0.0
    %253 = vmatpush1.msra.mxu0 %v161
    %254 = vmatprep.subr.mxu0 0.0
    %255 = vmatpush1.msra.mxu0 %v248
    %256 = vmatprep.subr.mxu0 0.0
    %257 = vmatpush1.msra.mxu0 0.0
    %258 = vmatprep.subr.mxu0 0.0
    %259 = vmatpush1.msra.mxu0 0.0
    %260 = vmatprep.subr.mxu0 0.0
    %261 = vmatpush1.msra.mxu0 0.0
    %262 = vmatprep.subr.mxu0 0.0
    %263 = vmatpush1.msra.mxu0 0.0
    %264 = vmatprep.subr.mxu0 0.0
    %265 = vmatpush1.msra.mxu0 0.0
    %266 = vmatprep.subr.mxu0 0.0
    %267 = vmatpush1.msra.mxu0 0.0
    %268 = vmatprep.subr.mxu0 0.0
    %269 = vmatpush1.msra.mxu0 0.0
    %270 = vmatprep.subr.mxu0 0.0
    %271 = vmatpush1.msra.mxu0 0.0
    %272 = vmatprep.subr.mxu0 0.0
    %273 = vmatpush1.msra.mxu0 0.0
    %274 = vmatprep.subr.mxu0 0.0
    %275 = vmatpush1.msra.mxu0 0.0
    %276 = vmatprep.subr.mxu0 0.0
    %277 = vmatpush1.msra.mxu0 0.0
    %278 = vmatprep.subr.mxu0 0.0
    %279 = vmatpush1.msra.mxu0 0.0
    %280 = vmatprep.subr.mxu0 0.0
    %281 = vmatpush1.msra.mxu0 0.0
    %282 = vmatprep.subr.mxu0 0.0
    %283 = vmatpush1.msra.mxu0 0.0
    %284 = vmatprep.subr.mxu0 0.0
    %285 = vmatpush1.msra.mxu0 0.0
    %286 = vmatprep.subr.mxu0 0.0
    %287 = vmatpush1.msra.mxu0 0.0
    %288 = vmatprep.subr.mxu0 0.0
    %289 = vmatpush1.msra.mxu0 0.0
    %290 = vmatprep.subr.mxu0 0.0
    %291 = vmatpush1.msra.mxu0 0.0
    %292 = vmatprep.subr.mxu0 0.0
    %293 = vmatpush1.msra.mxu0 0.0
    %294 = vmatprep.subr.mxu0 0.0
    %295 = vmatpush1.msra.mxu0 0.0
    %296 = vmatprep.subr.mxu0 0.0
    %297 = vmatpush1.msra.mxu0 0.0
    %298 = vmatprep.subr.mxu0 0.0
    %299 = vmatpush1.msra.mxu0 0.0
    %300 = vmatprep.subr.mxu0 0.0
    %301 = vmatpush1.msra.mxu0 0.0
    %302 = vmatprep.subr.mxu0 0.0
    %303 = vmatpush1.msra.mxu0 0.0
    %304 = vmatprep.subr.mxu0 0.0
    %305 = vmatpush1.msra.mxu0 0.0
    %306 = vmatprep.subr.mxu0 0.0
    %307 = vmatpush1.msra.mxu0 0.0
    %308 = vmatprep.subr.mxu0 0.0
    %309 = vmatpush1.msra.mxu0 0.0
    %310 = vmatprep.subr.mxu0 0.0
    %311 = vmatpush1.msra.mxu0 0.0
    %312 = vmatprep.subr.mxu0 0.0
    %313 = vmatpush1.msra.mxu0 0.0
    %314 = vmatprep.mubr.f32.mxu0 0.0
    %315 = vmatmul.mubr.f32.gmra.mrb[0].mxu0 %v245
    %v316 = vpop.f32.mrb[0].mxu0
    %v317 = vadd.f32 %v242, %v316
    %v318 = vpop.f32.mrb[0].mxu0
    %319 = vdwg.mxu0
    %s320 = scalar_lea.vmem %s3, 48
    %v321 = vld [vmem:[%s320] sm:$0xff]
    %v322 = vld [vmem:[%s320 + $0x8] sm:$0xff]
    %v323 = vld [vmem:[%s320 + $0x10] sm:$0xf]
    %v324 = vrot.slane %v159, 4
    %v325 = vsel %vm169, %v324, 0
    %v328 = vsel %vm56, %v323, 0
    %330 = vmatprep.subr.mxu0 0.0
    %331 = vmatpush1.msra.mxu0 %v321
    %332 = vmatprep.subr.mxu0 0.0
    %333 = vmatpush1.msra.mxu0 %v322
    %334 = vmatprep.subr.mxu0 0.0
    %335 = vmatpush1.msra.mxu0 %v328
    %336 = vmatprep.subr.mxu0 0.0
    %337 = vmatpush1.msra.mxu0 0.0
    %338 = vmatprep.subr.mxu0 0.0
    %339 = vmatpush1.msra.mxu0 0.0
    %340 = vmatprep.subr.mxu0 0.0
    %341 = vmatpush1.msra.mxu0 0.0
    %342 = vmatprep.subr.mxu0 0.0
    %343 = vmatpush1.msra.mxu0 0.0
    %344 = vmatprep.subr.mxu0 0.0
    %345 = vmatpush1.msra.mxu0 0.0
    %346 = vmatprep.subr.mxu0 0.0
    %347 = vmatpush1.msra.mxu0 0.0
    %348 = vmatprep.subr.mxu0 0.0
    %349 = vmatpush1.msra.mxu0 0.0
    %350 = vmatprep.subr.mxu0 0.0
    %351 = vmatpush1.msra.mxu0 0.0
    %352 = vmatprep.subr.mxu0 0.0
    %353 = vmatpush1.msra.mxu0 0.0
    %354 = vmatprep.subr.mxu0 0.0
    %355 = vmatpush1.msra.mxu0 0.0
    %356 = vmatprep.subr.mxu0 0.0
    %357 = vmatpush1.msra.mxu0 0.0
    %358 = vmatprep.subr.mxu0 0.0
    %359 = vmatpush1.msra.mxu0 0.0
    %360 = vmatprep.subr.mxu0 0.0
    %361 = vmatpush1.msra.mxu0 0.0
    %362 = vmatprep.subr.mxu0 0.0
    %363 = vmatpush1.msra.mxu0 0.0
    %364 = vmatprep.subr.mxu0 0.0
    %365 = vmatpush1.msra.mxu0 0.0
    %366 = vmatprep.subr.mxu0 0.0
    %367 = vmatpush1.msra.mxu0 0.0
    %368 = vmatprep.subr.mxu0 0.0
    %369 = vmatpush1.msra.mxu0 0.0
    %370 = vmatprep.subr.mxu0 0.0
    %371 = vmatpush1.msra.mxu0 0.0
    %372 = vmatprep.subr.mxu0 0.0
    %373 = vmatpush1.msra.mxu0 0.0
    %374 = vmatprep.subr.mxu0 0.0
    %375 = vmatpush1.msra.mxu0 0.0
    %376 = vmatprep.subr.mxu0 0.0
    %377 = vmatpush1.msra.mxu0 0.0
    %378 = vmatprep.subr.mxu0 0.0
    %379 = vmatpush1.msra.mxu0 0.0
    %380 = vmatprep.subr.mxu0 0.0
    %381 = vmatpush1.msra.mxu0 0.0
    %382 = vmatprep.subr.mxu0 0.0
    %383 = vmatpush1.msra.mxu0 0.0
    %384 = vmatprep.subr.mxu0 0.0
    %385 = vmatpush1.msra.mxu0 0.0
    %386 = vmatprep.subr.mxu0 0.0
    %387 = vmatpush1.msra.mxu0 0.0
    %388 = vmatprep.subr.mxu0 0.0
    %389 = vmatpush1.msra.mxu0 0.0
    %390 = vmatprep.subr.mxu0 0.0
    %391 = vmatpush1.msra.mxu0 0.0
    %392 = vmatprep.subr.mxu0 0.0
    %393 = vmatpush1.msra.mxu0 0.0
    %394 = vmatprep.mubr.f32.mxu0 0.0
    %395 = vmatmul.mubr.f32.gmra.mrb[0].mxu0 %v325
    %v396 = vpop.f32.mrb[0].mxu0
    %v397 = vadd.f32 0.0, %v396
    %v398 = vpop.f32.mrb[0].mxu0
    %399 = vdwg.mxu0
    %v400 = vadd.f32 %v317, %v397
    %s401 = scalar_lea.vmem %s3, 72
    %v402 = vld [vmem:[%s401] sm:$0xff]
    %v403 = vld [vmem:[%s401 + $0x8] sm:$0xff]
    %v404 = vld [vmem:[%s401 + $0x10] sm:$0xf]
    %v405 = vrot.slane %v159, 6
    %v406 = vsel %vm169, %v405, 0
    %v409 = vsel %vm56, %v404, 0
    %411 = vmatprep.subr.mxu0 0.0
    %412 = vmatpush1.msra.mxu0 %v402
    %413 = vmatprep.subr.mxu0 0.0
    %414 = vmatpush1.msra.mxu0 %v403
    %415 = vmatprep.subr.mxu0 0.0
    %416 = vmatpush1.msra.mxu0 %v409
    %417 = vmatprep.subr.mxu0 0.0
    %418 = vmatpush1.msra.mxu0 0.0
    %419 = vmatprep.subr.mxu0 0.0
    %420 = vmatpush1.msra.mxu0 0.0
    %421 = vmatprep.subr.mxu0 0.0
    %422 = vmatpush1.msra.mxu0 0.0
    %423 = vmatprep.subr.mxu0 0.0
    %424 = vmatpush1.msra.mxu0 0.0
    %425 = vmatprep.subr.mxu0 0.0
    %426 = vmatpush1.msra.mxu0 0.0
    %427 = vmatprep.subr.mxu0 0.0
    %428 = vmatpush1.msra.mxu0 0.0
    %429 = vmatprep.subr.mxu0 0.0
    %430 = vmatpush1.msra.mxu0 0.0
    %431 = vmatprep.subr.mxu0 0.0
    %432 = vmatpush1.msra.mxu0 0.0
    %433 = vmatprep.subr.mxu0 0.0
    %434 = vmatpush1.msra.mxu0 0.0
    %435 = vmatprep.subr.mxu0 0.0
    %436 = vmatpush1.msra.mxu0 0.0
    %437 = vmatprep.subr.mxu0 0.0
    %438 = vmatpush1.msra.mxu0 0.0
    %439 = vmatprep.subr.mxu0 0.0
    %440 = vmatpush1.msra.mxu0 0.0
    %441 = vmatprep.subr.mxu0 0.0
    %442 = vmatpush1.msra.mxu0 0.0
    %443 = vmatprep.subr.mxu0 0.0
    %444 = vmatpush1.msra.mxu0 0.0
    %445 = vmatprep.subr.mxu0 0.0
    %446 = vmatpush1.msra.mxu0 0.0
    %447 = vmatprep.subr.mxu0 0.0
    %448 = vmatpush1.msra.mxu0 0.0
    %449 = vmatprep.subr.mxu0 0.0
    %450 = vmatpush1.msra.mxu0 0.0
    %451 = vmatprep.subr.mxu0 0.0
    %452 = vmatpush1.msra.mxu0 0.0
    %453 = vmatprep.subr.mxu0 0.0
    %454 = vmatpush1.msra.mxu0 0.0
    %455 = vmatprep.subr.mxu0 0.0
    %456 = vmatpush1.msra.mxu0 0.0
    %457 = vmatprep.subr.mxu0 0.0
    %458 = vmatpush1.msra.mxu0 0.0
    %459 = vmatprep.subr.mxu0 0.0
    %460 = vmatpush1.msra.mxu0 0.0
    %461 = vmatprep.subr.mxu0 0.0
    %462 = vmatpush1.msra.mxu0 0.0
    %463 = vmatprep.subr.mxu0 0.0
    %464 = vmatpush1.msra.mxu0 0.0
    %465 = vmatprep.subr.mxu0 0.0
    %466 = vmatpush1.msra.mxu0 0.0
    %467 = vmatprep.subr.mxu0 0.0
    %468 = vmatpush1.msra.mxu0 0.0
    %469 = vmatprep.subr.mxu0 0.0
    %470 = vmatpush1.msra.mxu0 0.0
    %471 = vmatprep.subr.mxu0 0.0
    %472 = vmatpush1.msra.mxu0 0.0
    %473 = vmatprep.subr.mxu0 0.0
    %474 = vmatpush1.msra.mxu0 0.0
    %475 = vmatprep.mubr.f32.mxu0 0.0
    %476 = vmatmul.mubr.f32.gmra.mrb[0].mxu0 %v406
    %v477 = vpop.f32.mrb[0].mxu0
    %v478 = vadd.f32 0.0, %v477
    %v479 = vpop.f32.mrb[0].mxu0
    %480 = vdwg.mxu0
    %v481 = vadd.f32 %v400, %v478
    %v482 = vld [vmem:[%s4] sm:$0x1]
    %v484 = vlaneseq
    %v485 = vshrl.u32 %v484, 7
    %v486 = vsub.s32 0, %v485
    %v487 = vrot.slane %v482, %v486
    %v489 = vadd.f32 %v481, %v487
    %vm490 = vcmp.gt.f32.partialorder %v489, 0.0
    %v491 = vmul.f32 %v489, 0.01
    %v492 = vsel %vm490, %v489, %v491
    %v493 = vld [vmem:[%s5] sm:$0xff]
    %v494 = vld [vmem:[%s5 + $0x8] sm:$0xff]
    %v495 = vld [vmem:[%s5 + $0x10] sm:$0xff]
    %v496 = vld [vmem:[%s5 + $0x18] sm:$0xff]
    %v497 = vld [vmem:[%s5 + $0x20] sm:$0xff]
    %v498 = vld [vmem:[%s5 + $0x28] sm:$0xff]
    %v499 = vld [vmem:[%s5 + $0x30] sm:$0xff]
    %v500 = vld [vmem:[%s5 + $0x38] sm:$0xff]
    %v501 = vld [vmem:[%s5 + $0x40] sm:$0xff]
    %v502 = vld [vmem:[%s5 + $0x48] sm:$0xff]
    %v503 = vld [vmem:[%s5 + $0x50] sm:$0xff]
    %v504 = vld [vmem:[%s5 + $0x58] sm:$0xff]
    %v505 = vld [vmem:[%s5 + $0x60] sm:$0xff]
    %v506 = vld [vmem:[%s5 + $0x68] sm:$0xff]
    %v507 = vld [vmem:[%s5 + $0x70] sm:$0xff]
    %v508 = vld [vmem:[%s5 + $0x78] sm:$0xff]
    %v509 = vld [vmem:[%s6] sm:$0x1]
    %v511 = vlaneseq
    %v512 = vshrl.u32 %v511, 7
    %v513 = vsub.s32 0, %v512
    %v514 = vrot.slane %v509, %v513
    %516 = vmatprep.subr.mxu0 0.0
    %517 = vmatpush1.msra.mxu0 %v493
    %518 = vmatprep.subr.mxu0 0.0
    %519 = vmatpush1.msra.mxu0 %v494
    %520 = vmatprep.subr.mxu0 0.0
    %521 = vmatpush1.msra.mxu0 %v495
    %522 = vmatprep.subr.mxu0 0.0
    %523 = vmatpush1.msra.mxu0 %v496
    %524 = vmatprep.subr.mxu0 0.0
    %525 = vmatpush1.msra.mxu0 %v497
    %526 = vmatprep.subr.mxu0 0.0
    %527 = vmatpush1.msra.mxu0 %v498
    %528 = vmatprep.subr.mxu0 0.0
    %529 = vmatpush1.msra.mxu0 %v499
    %530 = vmatprep.subr.mxu0 0.0
    %531 = vmatpush1.msra.mxu0 %v500
    %532 = vmatprep.subr.mxu0 0.0
    %533 = vmatpush1.msra.mxu0 %v501
    %534 = vmatprep.subr.mxu0 0.0
    %535 = vmatpush1.msra.mxu0 %v502
    %536 = vmatprep.subr.mxu0 0.0
    %537 = vmatpush1.msra.mxu0 %v503
    %538 = vmatprep.subr.mxu0 0.0
    %539 = vmatpush1.msra.mxu0 %v504
    %540 = vmatprep.subr.mxu0 0.0
    %541 = vmatpush1.msra.mxu0 %v505
    %542 = vmatprep.subr.mxu0 0.0
    %543 = vmatpush1.msra.mxu0 %v506
    %544 = vmatprep.subr.mxu0 0.0
    %545 = vmatpush1.msra.mxu0 %v507
    %546 = vmatprep.subr.mxu0 0.0
    %547 = vmatpush1.msra.mxu0 %v508
    %548 = vmatprep.subr.mxu0 0.0
    %549 = vmatpush1.msra.mxu0 0.0
    %550 = vmatprep.subr.mxu0 0.0
    %551 = vmatpush1.msra.mxu0 0.0
    %552 = vmatprep.subr.mxu0 0.0
    %553 = vmatpush1.msra.mxu0 0.0
    %554 = vmatprep.subr.mxu0 0.0
    %555 = vmatpush1.msra.mxu0 0.0
    %556 = vmatprep.subr.mxu0 0.0
    %557 = vmatpush1.msra.mxu0 0.0
    %558 = vmatprep.subr.mxu0 0.0
    %559 = vmatpush1.msra.mxu0 0.0
    %560 = vmatprep.subr.mxu0 0.0
    %561 = vmatpush1.msra.mxu0 0.0
    %562 = vmatprep.subr.mxu0 0.0
    %563 = vmatpush1.msra.mxu0 0.0
    %564 = vmatprep.subr.mxu0 0.0
    %565 = vmatpush1.msra.mxu0 0.0
    %566 = vmatprep.subr.mxu0 0.0
    %567 = vmatpush1.msra.mxu0 0.0
    %568 = vmatprep.subr.mxu0 0.0
    %569 = vmatpush1.msra.mxu0 0.0
    %570 = vmatprep.subr.mxu0 0.0
    %571 = vmatpush1.msra.mxu0 0.0
    %572 = vmatprep.subr.mxu0 0.0
    %573 = vmatpush1.msra.mxu0 0.0
    %574 = vmatprep.subr.mxu0 0.0
    %575 = vmatpush1.msra.mxu0 0.0
    %576 = vmatprep.subr.mxu0 0.0
    %577 = vmatpush1.msra.mxu0 0.0
    %578 = vmatprep.subr.mxu0 0.0
    %579 = vmatpush1.msra.mxu0 0.0
    %580 = vmatprep.mubr.f32.mxu0 0.0
    %581 = vmatmul.mubr.f32.gmra.mrb[0].mxu0 %v492
    %v582 = vpop.f32.mrb[0].mxu0
    %v583 = vadd.f32 %v514, %v582
    %v584 = vpop.f32.mrb[0].mxu0
    %585 = vdwg.mxu0
    %586 = vst [vmem:[#allocation2] sm:$0x3] %v583
    // Predicated region
    $region30: #{forward.1} parent=1 // pred_check
      _
    $region31: #{forward.1} parent=1 // pred_check_branch
      %588 = sbr.rel (0) target = $region33
    $region32: #{forward.1} parent=1 // pred_region
      %s590 = ssub.s32 32, 32
      %591 = vsyncadd [#allocation3], %s590
      %s593 = sshll.u32 [#allocation2], 4
      %s594 = int_to_ptr.vmem [resolvable:$true] %s593
      %596 = dma.vmem_to_hbm [thread:$0]  %s594, 32, %s7, [#allocation3]
    $region33: #{forward.1} parent=1 // pred_fallthru
      _
    // Predicated region
    $region34: #{forward.1} parent=1 // pred_check
      _
    $region35: #{forward.1} parent=1 // pred_check_branch
      %598 = sbr.rel (0) target = $region37
    $region36: #{forward.1} parent=1 // pred_region
      %599 = dma.done [#allocation3], 32
    $region37: #{forward.1} parent=1 // pred_fallthru
      _
    %600 = vsyncpa [#allocation3], 1

</llo_original>
